<compile_context>
chip_gen: v6e
topology: v6e:2x2x1
jax: 0.10.0
libtpu: 0.0.40
codegen_flags: <defaults>
</compile_context>

<pallas_src>
import jax
import jax.numpy as jnp
from jax.experimental import pallas as pl
from jax.experimental.pallas import tpu as pltpu

C = 1                 # channels (fixed by Linear(196, 10): 1 * 14 * 14 = 196)
H = W = 28            # input spatial
PH, PW = H // 2, W // 2
F_IN = C * PH * PW    # 196
F_OUT = 10
K_PAD = 256           # F_IN padded to a lane-dense multiple of 128
N_PAD = 128           # F_OUT padded to exactly one lane tile (do NOT enlarge)


def _round_up(n, m):
    return (n + m - 1) // m * m


def net_kernel(x_ref, w_ref, b_ref, o_ref):
    # x_ref: (4, TB, K_PAD) compute_dtype -- the 4 positions of each 2x2 pool window
    # w_ref: (K_PAD, N_PAD) compute_dtype -- fc1 weight (in, out), zero-padded
    # b_ref: (1, N_PAD) f32               -- fc1 bias, zero-padded
    # o_ref: (TB, N_PAD) f32
    #
    # Slab-wise reads: at most two (TB, K_PAD) slabs are live at once, so the f32
    # full-block materialization (and its vreg spills) from the previous version
    # is gone.  Non-overlapping 2x2 max pool == elementwise max of the 4 slabs.
    pooled = jnp.maximum(jnp.maximum(x_ref[0], x_ref[1]),
                         jnp.maximum(x_ref[2], x_ref[3]))
    # Linear on the MXU (operands in compute dtype, f32 accumulation); bias + ReLU f32.
    y = jnp.dot(pooled, w_ref[...], preferred_element_type=jnp.float32) + b_ref[...]
    o_ref[...] = jnp.maximum(y, 0.0)


def net_forward(x, w, b, *, block_b=512, compute_dtype=jnp.bfloat16):
    """x: (B, 1, 28, 28) f32; w: (10, 196) PyTorch (out, in) layout; b: (10,) f32.

    NOTE: the PyTorch forward uses x.view(4, -1); with C == 1 this equals a
    per-sample flatten only when B == 4, which is what this wrapper implements.
    """
    B = x.shape[0]
    itemsize = jnp.dtype(compute_dtype).itemsize

    # Batch tile: sublane-aligned, capped so double-buffered x (4 slabs) stays
    # <= ~16 MiB (v5e scoped-VMEM default; far below v7x's 32/64 MiB budget).
    max_tb = (16 * 1024 * 1024) // (2 * 4 * K_PAD * itemsize)   # 4096 bf16 / 2048 f32
    tb = min(block_b, max_tb, _round_up(B, 8))
    bp = _round_up(B, tb)
    # v7x has 2 TensorCores: with ("parallel",) semantics a single grid step leaves
    # one core idle, so split into >= 2 tiles when the (padded) batch allows it.
    if bp // tb < 2 and tb >= 16:
        tb = _round_up(tb // 2, 8)
        bp = _round_up(B, tb)
    num_tiles = bp // tb

    # Gather the 4 positions of each 2x2 window: (b,c,i,p,j,q) -> (p,q,b,c,i,j)
    # -> (4, B, 196).  Flattening order (c,i,j) matches x.view(4, -1) post-pool.
    xw = x.reshape(B, C, PH, 2, PW, 2)
    xw = jnp.transpose(xw, (3, 5, 0, 1, 2, 4)).reshape(4, B, F_IN)
    # Cast to the compute dtype *before* the pool (monotone cast commutes with max),
    # then zero-pad batch to a tile multiple and features to the lane-dense K_PAD.
    xw = jnp.pad(xw.astype(compute_dtype),
                 ((0, 0), (0, bp - B), (0, K_PAD - F_IN)))

    # Weight: (out, in) -> (in, out), zero-padded to (K_PAD, N_PAD), compute dtype.
    w_p = jnp.pad(w.T, ((0, K_PAD - F_IN), (0, N_PAD - F_OUT))).astype(compute_dtype)
    b_p = jnp.pad(b, (0, N_PAD - F_OUT)).reshape(1, N_PAD).astype(jnp.float32)

    # Kernel-only traffic estimate (wrapper-side gather traffic not included).
    cost = pl.CostEstimate(
        flops=2 * bp * K_PAD * N_PAD + 4 * bp * K_PAD + 2 * bp * N_PAD,
        transcendentals=0,
        bytes_accessed=(4 * bp * K_PAD * itemsize            # x slabs
                        + K_PAD * N_PAD * itemsize           # weight
                        + N_PAD * 4                          # bias
                        + bp * N_PAD * 4),                   # output
    )

    out = pl.pallas_call(
        net_kernel,
        out_shape=jax.ShapeDtypeStruct((bp, N_PAD), jnp.float32),
        grid=(num_tiles,),
        in_specs=[
            pl.BlockSpec((4, tb, K_PAD), lambda i: (0, i, 0)),
            pl.BlockSpec((K_PAD, N_PAD), lambda i: (0, 0)),   # resident across steps
            pl.BlockSpec((1, N_PAD), lambda i: (0, 0)),       # resident across steps
        ],
        out_specs=pl.BlockSpec((tb, N_PAD), lambda i: (i, 0)),
        compiler_params=pltpu.CompilerParams(
            dimension_semantics=("parallel",),
            allow_input_fusion=[True, True, True],
        ),
        cost_estimate=cost,
    )(xw, w_p, b_p)

    # Drop batch / lane padding.
    return out[:B, :F_OUT]


def reference_forward(x, w, b):
    # Pure-JAX reference mirroring the PyTorch forward exactly (f32 everywhere).
    B = x.shape[0]
    pooled = jnp.max(x.reshape(B, C, PH, 2, PW, 2), axis=(3, 5))   # MaxPool2d(2, 2)
    flat = pooled.reshape(4, -1)                                   # x.view(4, -1)
    return jnp.maximum(flat @ w.T + b, 0.0)                        # relu(fc1(x))


if __name__ == "__main__":
    key = jax.random.PRNGKey(0)
    kx, kw, kb = jax.random.split(key, 3)

    # nn.Linear(196, 10) parameters in PyTorch (out, in) layout.
    bound = 1.0 / (F_IN ** 0.5)
    w = jax.random.uniform(kw, (F_OUT, F_IN), jnp.float32, -bound, bound)
    b = jax.random.uniform(kb, (F_OUT,), jnp.float32, -bound, bound)

    # Batch of 4 (fixed by x.view(4, -1) in the PyTorch forward), NCHW.
    x = jax.random.normal(kx, (4, C, H, W), jnp.float32)

    fwd = jax.jit(net_forward)   # single dispatch: window gather + pad + pallas_call
    out = jax.block_until_ready(fwd(x, w, b))

    ref = reference_forward(x, w, b)
    assert out.shape == (4, F_OUT)
    # bf16 MXU operands (f32 accumulation) -> tolerance loosened vs the f32 reference.
    assert jnp.allclose(out, ref, atol=3e-2, rtol=3e-2), "mismatch vs reference"

    print("KERNEL_OK")
</pallas_src>

<mosaic_0001>
module attributes {stable_mosaic.version = 11 : i64} {
  func.func @net_kernel(%arg0: i32, %arg1: memref<4x8x256xbf16, #tpu.memory_space<vmem>>, %arg2: memref<256x128xbf16, #tpu.memory_space<vmem>>, %arg3: memref<1x128xf32, #tpu.memory_space<vmem>>, %arg4: memref<8x128xf32, #tpu.memory_space<vmem>>) attributes {dimension_semantics = [#tpu.dimension_semantics<parallel>], iteration_bounds = array<i64: 1>, scalar_prefetch = 0 : i64, scratch_operands = 0 : i64, tpu.core_type = #tpu.core_type<tc>, window_params = [{transform_indices = @transform_0, window_bounds = array<i64: 4, 8, 256>}, {pipeline_mode = #tpu.pipeline_mode<synchronous>, transform_indices = @transform_1, window_bounds = array<i64: 256, 128>}, {pipeline_mode = #tpu.pipeline_mode<synchronous>, transform_indices = @transform_2, window_bounds = array<i64: 1, 128>}, {transform_indices = @transform_3, window_bounds = array<i64: 8, 128>}]} {
    %c0 = arith.constant 0 : index
    %c0_0 = arith.constant 0 : index
    %c0_1 = arith.constant 0 : index
    %0 = vector.load %arg1[%c0, %c0_0, %c0_1] : memref<4x8x256xbf16, #tpu.memory_space<vmem>>, vector<1x8x256xbf16>
    %1 = vector.shape_cast %0 : vector<1x8x256xbf16> to vector<8x256xbf16>
    %c1 = arith.constant 1 : index
    %c0_2 = arith.constant 0 : index
    %c0_3 = arith.constant 0 : index
    %2 = vector.load %arg1[%c1, %c0_2, %c0_3] : memref<4x8x256xbf16, #tpu.memory_space<vmem>>, vector<1x8x256xbf16>
    %3 = vector.shape_cast %2 : vector<1x8x256xbf16> to vector<8x256xbf16>
    %4 = arith.maximumf %1, %3 : vector<8x256xbf16>
    %c2 = arith.constant 2 : index
    %c0_4 = arith.constant 0 : index
    %c0_5 = arith.constant 0 : index
    %5 = vector.load %arg1[%c2, %c0_4, %c0_5] : memref<4x8x256xbf16, #tpu.memory_space<vmem>>, vector<1x8x256xbf16>
    %6 = vector.shape_cast %5 : vector<1x8x256xbf16> to vector<8x256xbf16>
    %c3 = arith.constant 3 : index
    %c0_6 = arith.constant 0 : index
    %c0_7 = arith.constant 0 : index
    %7 = vector.load %arg1[%c3, %c0_6, %c0_7] : memref<4x8x256xbf16, #tpu.memory_space<vmem>>, vector<1x8x256xbf16>
    %8 = vector.shape_cast %7 : vector<1x8x256xbf16> to vector<8x256xbf16>
    %9 = arith.maximumf %6, %8 : vector<8x256xbf16>
    %10 = arith.maximumf %4, %9 : vector<8x256xbf16>
    %c0_8 = arith.constant 0 : index
    %c0_9 = arith.constant 0 : index
    %11 = vector.load %arg2[%c0_8, %c0_9] : memref<256x128xbf16, #tpu.memory_space<vmem>>, vector<256x128xbf16>
    %cst = arith.constant dense<0.000000e+00> : vector<8x128xf32>
    %12 = tpu.matmul %10, %11, %cst {dimension_numbers = #tpu.dot_dimension_numbers<[1], [0], [0], [1], [0, 0, 1, 1], [], []>} : vector<8x256xbf16>, vector<256x128xbf16>, vector<8x128xf32> -> vector<8x128xf32>
    %c0_10 = arith.constant 0 : index
    %c0_11 = arith.constant 0 : index
    %13 = vector.load %arg3[%c0_10, %c0_11] : memref<1x128xf32, #tpu.memory_space<vmem>>, vector<1x128xf32>
    %14 = vector.broadcast %13 : vector<1x128xf32> to vector<8x128xf32>
    %15 = arith.addf %12, %14 : vector<8x128xf32>
    %cst_12 = arith.constant 0.000000e+00 : f32
    %16 = vector.broadcast %cst_12 : f32 to vector<8x128xf32>
    %17 = arith.maximumf %15, %16 : vector<8x128xf32>
    %c0_13 = arith.constant 0 : index
    %c0_14 = arith.constant 0 : index
    %18 = vector.load %arg4[%c0_13, %c0_14] : memref<8x128xf32, #tpu.memory_space<vmem>>, vector<8x128xf32>
    tpu.vector_store %arg4[%c0_13, %c0_14], %17 {strides = array<i32>} : memref<8x128xf32, #tpu.memory_space<vmem>>, vector<8x128xf32>,
    return
  }
  func.func @transform_0(%arg0: i32) -> (i32, i32, i32) {
    %c0_i32 = arith.constant 0 : i32
    %c0_i32_0 = arith.constant 0 : i32
    %c0_i32_1 = arith.constant 0 : i32
    return %c0_i32, %arg0, %c0_i32_0 : i32, i32, i32
  }
  func.func @transform_1(%arg0: i32) -> (i32, i32) {
    %c0_i32 = arith.constant 0 : i32
    %c0_i32_0 = arith.constant 0 : i32
    %c0_i32_1 = arith.constant 0 : i32
    return %c0_i32, %c0_i32_0 : i32, i32
  }
  func.func @transform_2(%arg0: i32) -> (i32, i32) {
    %c0_i32 = arith.constant 0 : i32
    %c0_i32_0 = arith.constant 0 : i32
    %c0_i32_1 = arith.constant 0 : i32
    return %c0_i32, %c0_i32_0 : i32, i32
  }
  func.func @transform_3(%arg0: i32) -> (i32, i32) {
    %c0_i32 = arith.constant 0 : i32
    %c0_i32_0 = arith.constant 0 : i32
    return %arg0, %c0_i32 : i32, i32
  }
}

</mosaic_0001>

<llo_original>
// kernel: net_forward.2
$region0: #{net_forward.2}
  #allocation0 [shape = 'u32[]', space=smem, size = 0x4, offset = 0x4, fixed_abs, tag = 'smem constant byte address 0x4 - core index']
  #allocation1 [shape = 'u32[144,128]{1,0:T(1,128)}', space=vmem, size = 0x12000, scoped, tag = 'internal scratch']
  #allocation2 [shape = 'u32[2048]{0}', space=vmem, size = 0x2000, scoped, tag = 'scoped memory for net_forward.2']
  #allocation3 [shape = 'u32[2048]{0}', space=vmem, size = 0x2000, scoped, tag = 'scoped memory for net_forward.2']
  #allocation4 [shape = 'u32[2048]{0}', space=vmem, size = 0x2000, scoped, tag = 'scoped memory for net_forward.2']
  #allocation5 [shape = 'u32[2048]{0}', space=vmem, size = 0x2000, scoped, tag = 'scoped memory for net_forward.2']
  #allocation6 [shape = 'u32[2048]{0}', space=vmem, size = 0x2000, scoped, tag = 'scoped memory for net_forward.2']
  #allocation7 [shape = 'u32[2048]{0}', space=vmem, size = 0x2000, scoped, tag = 'scoped memory for net_forward.2']
  #allocation8 [shape = 'u32[2048]{0}', space=vmem, size = 0x2000, scoped, tag = 'scoped memory for net_forward.2']
  #allocation9 [shape = 'u32[2048]{0}', space=vmem, size = 0x2000, scoped, tag = 'scoped memory for net_forward.2']
  #allocation10 [shape = 'u32[2048]{0}', space=vmem, size = 0x2000, scoped, tag = 'scoped memory for net_forward.2']
  #allocation11 [shape = 'u32[2048]{0}', space=vmem, size = 0x2000, scoped, tag = 'scoped memory for net_forward.2']
  #allocation12 [shape = 'u32[2048]{0}', space=vmem, size = 0x2000, scoped, tag = 'scoped memory for net_forward.2']
  #allocation13 [shape = 'u32[2048]{0}', space=vmem, size = 0x2000, scoped, tag = 'scoped memory for net_forward.2']
  #allocation14 [shape = 'u32[2048]{0}', space=vmem, size = 0x2000, scoped, tag = 'scoped memory for net_forward.2']
  #allocation15 [shape = 'u32[2048]{0}', space=vmem, size = 0x2000, scoped, tag = 'scoped memory for net_forward.2']
  #allocation16 [shape = 'u32[2048]{0}', space=vmem, size = 0x2000, scoped, tag = 'scoped memory for net_forward.2']
  %s0 = inlined_call_operand.vmem [shape: bf16[196,10], index: 0, kind: input, shape index: {}]
  %s1 = inlined_call_operand.<no memory space> [shape: bf16[], index: 1, kind: input, shape index: {}]
  %s2 = inlined_call_operand.vmem [shape: bf16[4,4,196], index: 2, kind: input, shape index: {}]
  %s3 = inlined_call_operand.vmem [shape: f32[10], index: 3, kind: input, shape index: {}]
  %s4 = inlined_call_operand.<no memory space> [shape: f32[], index: 4, kind: input, shape index: {}]
  %s5 = inlined_call_operand.vmem [shape: f32[8,128], index: 5, kind: output, shape index: {}]
  %s6 = sld [smem:[#allocation0]]
  $region22: #{net_forward.2} parent=0
    _
  %s8 = ssub.s32 1, %s6
  %s9 = scalar_select 0, %s8, %s6
  %v10 = vstv %s1
  %v11 = vunpack.i.l.bf16 %v10
  %v13 = vunpack.i.h.bf16 %v10
  %v15 = vstv %s1
  %v16 = vunpack.i.l.bf16 %v15
  %v18 = vunpack.i.h.bf16 %v15
  %v20 = vstv %s4
  $region1: #{net_forward.2} parent=0
    #allocation17 [shape = 'u8[16384]{0}', space=vmem, size = 0x4000, dematerialized = true, scoped, tag = 'FusionAdapter Buffer %fusion.2 = bf16[4,8,256]{2,1,0:T(8,128)(2,1)} fusion(%param_2.3, %param_1.5), kind=kLoop, calls=%fused_computation.2.clone, metadata={op_name="jit(net_forward)/jit(_pad)/pad" stack_frame_id=10}']
    #allocation18 [shape = 'u8[65536]{0}', space=vmem, size = 0x10000, dematerialized = true, scoped, tag = 'FusionAdapter Buffer %fusion.1 = bf16[256,128]{1,0:T(8,128)(2,1)} fusion(%param_0.4, %param_1.5), kind=kLoop, calls=%fused_computation.1.clone, metadata={op_name="jit(net_forward)/jit(_pad)/pad" stack_frame_id=12}']
    #allocation19 [shape = 'u8[512]{0}', space=vmem, size = 0x400, dematerialized = true, scoped, tag = 'FusionAdapter Buffer %fusion.3 = f32[1,128]{1,0:T(1,128)} fusion(%param_3.3, %param_4), kind=kLoop, calls=%fused_computation.3.clone, metadata={op_name="jit(net_forward)/reshape" stack_frame_id=15}']
    // Predicated region
    $region2: #{net_forward.2} parent=1 // pred_check
      _
    $region3: #{net_forward.2} parent=1 // pred_check_branch
      %22 = sbr.rel (0) target = $region5
    $region4: #{net_forward.2} parent=1 // pred_region
      _
    $region5: #{net_forward.2} parent=1 // pred_fallthru
      _
    // Predicated region
    $region6: #{net_forward.2} parent=1 // pred_check
      _
    $region7: #{net_forward.2} parent=1 // pred_check_branch
      %24 = sbr.rel (0) target = $region9
    $region8: #{net_forward.2} parent=1 // pred_region
      _
    $region9: #{net_forward.2} parent=1 // pred_fallthru
      _
    // Predicated region
    $region10: #{net_forward.2} parent=1 // pred_check
      _
    $region11: #{net_forward.2} parent=1 // pred_check_branch
      %26 = sbr.rel (0) target = $region13
    $region12: #{net_forward.2} parent=1 // pred_region
      _
    $region13: #{net_forward.2} parent=1 // pred_fallthru
      _
    %s28 = sor.u32 15, 7
    %s29 = sand.u32 %s28, 5
    %s30 = sshrl.u32 %s29, 1
    %s31 = sor.u32 %s29, %s30
    %s32 = sand.u32 3, %s31
    %v33 = vld [vmem:[%s2] sm:%s32]
    %v34 = vunpack.c.l.bf16 %v33
    %v35 = vunpack.c.h.bf16 %v33
    %v36 = vlaneseq
    %v37 = vshrl.u32 %v36, 7
    %vm39 = vcmp.lt.s32.totalorder %v37, 4
    %v40 = vsel %vm39, %v34, %v11
    %v41 = vlaneseq
    %v42 = vand.u32 %v41, 127
    %vm44 = vcmp.lt.s32.totalorder %v42, 196
    %v45 = vsel %vm44, %v40, %v11
    %v46 = vpack.c.bf16 0.0, %v45
    %s48 = ssub.s32 16, 1
    %49 = vst [vmem:[#allocation17] sm:%s48] %v46
    %s50 = scalar_lea.vmem %s2, 2
    %s52 = sor.u32 15, 7
    %s53 = sand.u32 %s52, 5
    %s54 = sshrl.u32 %s53, 1
    %s55 = sor.u32 %s53, %s54
    %s56 = sand.u32 3, %s55
    %v57 = vld [vmem:[%s50] sm:%s56]
    %v58 = vunpack.c.l.bf16 %v57
    %v59 = vunpack.c.h.bf16 %v57
    %v60 = vlaneseq
    %v61 = vshrl.u32 %v60, 7
    %vm63 = vcmp.lt.s32.totalorder %v61, 4
    %v64 = vsel %vm63, %v58, %v11
    %v65 = vlaneseq
    %v66 = vand.u32 %v65, 127
    %v67 = vadd.s32 %v66, 128
    %vm68 = vcmp.lt.s32.totalorder %v67, 196
    %v69 = vsel %vm68, %v64, %v11
    %s70 = scalar_lea.vmem [#allocation17], 4
    %v71 = vpack.c.bf16 0.0, %v69
    %s73 = ssub.s32 16, 1
    %74 = vst [vmem:[%s70] sm:%s73] %v71
    %s75 = scalar_lea.vmem %s2, 4
    %s77 = sor.u32 15, 7
    %s78 = sand.u32 %s77, 5
    %s79 = sshrl.u32 %s78, 1
    %s80 = sor.u32 %s78, %s79
    %s81 = sand.u32 3, %s80
    %v82 = vld [vmem:[%s75] sm:%s81]
    %v83 = vunpack.c.l.bf16 %v82
    %v84 = vunpack.c.h.bf16 %v82
    %v85 = vlaneseq
    %v86 = vshrl.u32 %v85, 7
    %vm88 = vcmp.lt.s32.totalorder %v86, 4
    %v89 = vsel %vm88, %v83, %v11
    %v90 = vlaneseq
    %v91 = vand.u32 %v90, 127
    %vm93 = vcmp.lt.s32.totalorder %v91, 196
    %v94 = vsel %vm93, %v89, %v11
    %s95 = scalar_lea.vmem [#allocation17], 8
    %v96 = vpack.c.bf16 0.0, %v94
    %s98 = ssub.s32 16, 1
    %99 = vst [vmem:[%s95] sm:%s98] %v96
    %s100 = scalar_lea.vmem %s2, 6
    %s102 = sor.u32 15, 7
    %s103 = sand.u32 %s102, 5
    %s104 = sshrl.u32 %s103, 1
    %s105 = sor.u32 %s103, %s104
    %s106 = sand.u32 3, %s105
    %v107 = vld [vmem:[%s100] sm:%s106]
    %v108 = vunpack.c.l.bf16 %v107
    %v109 = vunpack.c.h.bf16 %v107
    %v110 = vlaneseq
    %v111 = vshrl.u32 %v110, 7
    %vm113 = vcmp.lt.s32.totalorder %v111, 4
    %v114 = vsel %vm113, %v108, %v11
    %v115 = vlaneseq
    %v116 = vand.u32 %v115, 127
    %v117 = vadd.s32 %v116, 128
    %vm118 = vcmp.lt.s32.totalorder %v117, 196
    %v119 = vsel %vm118, %v114, %v11
    %s120 = scalar_lea.vmem [#allocation17], 12
    %v121 = vpack.c.bf16 0.0, %v119
    %s123 = ssub.s32 16, 1
    %124 = vst [vmem:[%s120] sm:%s123] %v121
    %s125 = scalar_lea.vmem %s2, 8
    %s127 = sor.u32 15, 7
    %s128 = sand.u32 %s127, 5
    %s129 = sshrl.u32 %s128, 1
    %s130 = sor.u32 %s128, %s129
    %s131 = sand.u32 3, %s130
    %v132 = vld [vmem:[%s125] sm:%s131]
    %v133 = vunpack.c.l.bf16 %v132
    %v134 = vunpack.c.h.bf16 %v132
    %v135 = vlaneseq
    %v136 = vshrl.u32 %v135, 7
    %vm138 = vcmp.lt.s32.totalorder %v136, 4
    %v139 = vsel %vm138, %v133, %v11
    %v140 = vlaneseq
    %v141 = vand.u32 %v140, 127
    %vm143 = vcmp.lt.s32.totalorder %v141, 196
    %v144 = vsel %vm143, %v139, %v11
    %s145 = scalar_lea.vmem [#allocation17], 16
    %v146 = vpack.c.bf16 0.0, %v144
    %s148 = ssub.s32 16, 1
    %149 = vst [vmem:[%s145] sm:%s148] %v146
    %s150 = scalar_lea.vmem %s2, 10
    %s152 = sor.u32 15, 7
    %s153 = sand.u32 %s152, 5
    %s154 = sshrl.u32 %s153, 1
    %s155 = sor.u32 %s153, %s154
    %s156 = sand.u32 3, %s155
    %v157 = vld [vmem:[%s150] sm:%s156]
    %v158 = vunpack.c.l.bf16 %v157
    %v159 = vunpack.c.h.bf16 %v157
    %v160 = vlaneseq
    %v161 = vshrl.u32 %v160, 7
    %vm163 = vcmp.lt.s32.totalorder %v161, 4
    %v164 = vsel %vm163, %v158, %v11
    %v165 = vlaneseq
    %v166 = vand.u32 %v165, 127
    %v167 = vadd.s32 %v166, 128
    %vm168 = vcmp.lt.s32.totalorder %v167, 196
    %v169 = vsel %vm168, %v164, %v11
    %s170 = scalar_lea.vmem [#allocation17], 20
    %v171 = vpack.c.bf16 0.0, %v169
    %s173 = ssub.s32 16, 1
    %174 = vst [vmem:[%s170] sm:%s173] %v171
    %s175 = scalar_lea.vmem %s2, 12
    %s177 = sor.u32 15, 7
    %s178 = sand.u32 %s177, 5
    %s179 = sshrl.u32 %s178, 1
    %s180 = sor.u32 %s178, %s179
    %s181 = sand.u32 3, %s180
    %v182 = vld [vmem:[%s175] sm:%s181]
    %v183 = vunpack.c.l.bf16 %v182
    %v184 = vunpack.c.h.bf16 %v182
    %v185 = vlaneseq
    %v186 = vshrl.u32 %v185, 7
    %vm188 = vcmp.lt.s32.totalorder %v186, 4
    %v189 = vsel %vm188, %v183, %v11
    %v190 = vlaneseq
    %v191 = vand.u32 %v190, 127
    %vm193 = vcmp.lt.s32.totalorder %v191, 196
    %v194 = vsel %vm193, %v189, %v11
    %s195 = scalar_lea.vmem [#allocation17], 24
    %v196 = vpack.c.bf16 0.0, %v194
    %s198 = ssub.s32 16, 1
    %199 = vst [vmem:[%s195] sm:%s198] %v196
    %s200 = scalar_lea.vmem %s2, 14
    %s202 = sor.u32 15, 7
    %s203 = sand.u32 %s202, 5
    %s204 = sshrl.u32 %s203, 1
    %s205 = sor.u32 %s203, %s204
    %s206 = sand.u32 3, %s205
    %v207 = vld [vmem:[%s200] sm:%s206]
    %v208 = vunpack.c.l.bf16 %v207
    %v209 = vunpack.c.h.bf16 %v207
    %v210 = vlaneseq
    %v211 = vshrl.u32 %v210, 7
    %vm213 = vcmp.lt.s32.totalorder %v211, 4
    %v214 = vsel %vm213, %v208, %v11
    %v215 = vlaneseq
    %v216 = vand.u32 %v215, 127
    %v217 = vadd.s32 %v216, 128
    %vm218 = vcmp.lt.s32.totalorder %v217, 196
    %v219 = vsel %vm218, %v214, %v11
    %s220 = scalar_lea.vmem [#allocation17], 28
    %v221 = vpack.c.bf16 0.0, %v219
    %s223 = ssub.s32 16, 1
    %224 = vst [vmem:[%s220] sm:%s223] %v221
    %s226 = sor.u32 255, 127
    %s227 = sand.u32 %s226, 85
    %s228 = sshrl.u32 %s227, 1
    %s229 = sor.u32 %s227, %s228
    %s230 = sand.u32 51, %s229
    %s231 = sshrl.u32 %s230, 2
    %s232 = sor.u32 %s230, %s231
    %s233 = sand.u32 15, %s232
    %v234 = vld [vmem:[%s0] sm:%s233]
    %v235 = vunpack.c.l.bf16 %v234
    %v236 = vunpack.c.h.bf16 %v234
    %v237 = vlaneseq
    %v238 = vshrl.u32 %v237, 7
    %vm240 = vcmp.lt.s32.totalorder %v238, 196
    %v241 = vsel %vm240, %v235, %v16
    %v242 = vlaneseq
    %v243 = vand.u32 %v242, 127
    %vm245 = vcmp.lt.s32.totalorder %v243, 10
    %v246 = vsel %vm245, %v241, %v16
    %v247 = vpack.c.bf16 0.0, %v246
    %s249 = ssub.s32 16, 1
    %250 = vst [vmem:[#allocation18] sm:%s249] %v247
    %s251 = scalar_lea.vmem %s0, 4
    %s253 = sor.u32 255, 127
    %s254 = sand.u32 %s253, 85
    %s255 = sshrl.u32 %s254, 1
    %s256 = sor.u32 %s254, %s255
    %s257 = sand.u32 51, %s256
    %s258 = sshrl.u32 %s257, 2
    %s259 = sor.u32 %s257, %s258
    %s260 = sand.u32 15, %s259
    %v261 = vld [vmem:[%s251] sm:%s260]
    %v262 = vunpack.c.l.bf16 %v261
    %v263 = vunpack.c.h.bf16 %v261
    %v264 = vlaneseq
    %v265 = vshrl.u32 %v264, 7
    %v266 = vadd.s32 %v265, 8
    %vm267 = vcmp.lt.s32.totalorder %v266, 196
    %v268 = vsel %vm267, %v262, %v16
    %v269 = vlaneseq
    %v270 = vand.u32 %v269, 127
    %vm272 = vcmp.lt.s32.totalorder %v270, 10
    %v273 = vsel %vm272, %v268, %v16
    %s274 = scalar_lea.vmem [#allocation18], 4
    %v275 = vpack.c.bf16 0.0, %v273
    %s277 = ssub.s32 16, 1
    %278 = vst [vmem:[%s274] sm:%s277] %v275
    %s279 = scalar_lea.vmem %s0, 8
    %s281 = sor.u32 255, 127
    %s282 = sand.u32 %s281, 85
    %s283 = sshrl.u32 %s282, 1
    %s284 = sor.u32 %s282, %s283
    %s285 = sand.u32 51, %s284
    %s286 = sshrl.u32 %s285, 2
    %s287 = sor.u32 %s285, %s286
    %s288 = sand.u32 15, %s287
    %v289 = vld [vmem:[%s279] sm:%s288]
    %v290 = vunpack.c.l.bf16 %v289
    %v291 = vunpack.c.h.bf16 %v289
    %v292 = vlaneseq
    %v293 = vshrl.u32 %v292, 7
    %v294 = vadd.s32 %v293, 16
    %vm295 = vcmp.lt.s32.totalorder %v294, 196
    %v296 = vsel %vm295, %v290, %v16
    %v297 = vlaneseq
    %v298 = vand.u32 %v297, 127
    %vm300 = vcmp.lt.s32.totalorder %v298, 10
    %v301 = vsel %vm300, %v296, %v16
    %s302 = scalar_lea.vmem [#allocation18], 8
    %v303 = vpack.c.bf16 0.0, %v301
    %s305 = ssub.s32 16, 1
    %306 = vst [vmem:[%s302] sm:%s305] %v303
    %s307 = scalar_lea.vmem %s0, 12
    %s309 = sor.u32 255, 127
    %s310 = sand.u32 %s309, 85
    %s311 = sshrl.u32 %s310, 1
    %s312 = sor.u32 %s310, %s311
    %s313 = sand.u32 51, %s312
    %s314 = sshrl.u32 %s313, 2
    %s315 = sor.u32 %s313, %s314
    %s316 = sand.u32 15, %s315
    %v317 = vld [vmem:[%s307] sm:%s316]
    %v318 = vunpack.c.l.bf16 %v317
    %v319 = vunpack.c.h.bf16 %v317
    %v320 = vlaneseq
    %v321 = vshrl.u32 %v320, 7
    %v322 = vadd.s32 %v321, 24
    %vm323 = vcmp.lt.s32.totalorder %v322, 196
    %v324 = vsel %vm323, %v318, %v16
    %v325 = vlaneseq
    %v326 = vand.u32 %v325, 127
    %vm328 = vcmp.lt.s32.totalorder %v326, 10
    %v329 = vsel %vm328, %v324, %v16
    %s330 = scalar_lea.vmem [#allocation18], 12
    %v331 = vpack.c.bf16 0.0, %v329
    %s333 = ssub.s32 16, 1
    %334 = vst [vmem:[%s330] sm:%s333] %v331
    %s335 = scalar_lea.vmem %s0, 16
    %s337 = sor.u32 255, 127
    %s338 = sand.u32 %s337, 85
    %s339 = sshrl.u32 %s338, 1
    %s340 = sor.u32 %s338, %s339
    %s341 = sand.u32 51, %s340
    %s342 = sshrl.u32 %s341, 2
    %s343 = sor.u32 %s341, %s342
    %s344 = sand.u32 15, %s343
    %v345 = vld [vmem:[%s335] sm:%s344]
    %v346 = vunpack.c.l.bf16 %v345
    %v347 = vunpack.c.h.bf16 %v345
    %v348 = vlaneseq
    %v349 = vshrl.u32 %v348, 7
    %v350 = vadd.s32 %v349, 32
    %vm351 = vcmp.lt.s32.totalorder %v350, 196
    %v352 = vsel %vm351, %v346, %v16
    %v353 = vlaneseq
    %v354 = vand.u32 %v353, 127
    %vm356 = vcmp.lt.s32.totalorder %v354, 10
    %v357 = vsel %vm356, %v352, %v16
    %s358 = scalar_lea.vmem [#allocation18], 16
    %v359 = vpack.c.bf16 0.0, %v357
    %s361 = ssub.s32 16, 1
    %362 = vst [vmem:[%s358] sm:%s361] %v359
    %s363 = scalar_lea.vmem %s0, 20
    %s365 = sor.u32 255, 127
    %s366 = sand.u32 %s365, 85
    %s367 = sshrl.u32 %s366, 1
    %s368 = sor.u32 %s366, %s367
    %s369 = sand.u32 51, %s368
    %s370 = sshrl.u32 %s369, 2
    %s371 = sor.u32 %s369, %s370
    %s372 = sand.u32 15, %s371
    %v373 = vld [vmem:[%s363] sm:%s372]
    %v374 = vunpack.c.l.bf16 %v373
    %v375 = vunpack.c.h.bf16 %v373
    %v376 = vlaneseq
    %v377 = vshrl.u32 %v376, 7
    %v378 = vadd.s32 %v377, 40
    %vm379 = vcmp.lt.s32.totalorder %v378, 196
    %v380 = vsel %vm379, %v374, %v16
    %v381 = vlaneseq
    %v382 = vand.u32 %v381, 127
    %vm384 = vcmp.lt.s32.totalorder %v382, 10
    %v385 = vsel %vm384, %v380, %v16
    %s386 = scalar_lea.vmem [#allocation18], 20
    %v387 = vpack.c.bf16 0.0, %v385
    %s389 = ssub.s32 16, 1
    %390 = vst [vmem:[%s386] sm:%s389] %v387
    %s391 = scalar_lea.vmem %s0, 24
    %s393 = sor.u32 255, 127
    %s394 = sand.u32 %s393, 85
    %s395 = sshrl.u32 %s394, 1
    %s396 = sor.u32 %s394, %s395
    %s397 = sand.u32 51, %s396
    %s398 = sshrl.u32 %s397, 2
    %s399 = sor.u32 %s397, %s398
    %s400 = sand.u32 15, %s399
    %v401 = vld [vmem:[%s391] sm:%s400]
    %v402 = vunpack.c.l.bf16 %v401
    %v403 = vunpack.c.h.bf16 %v401
    %v404 = vlaneseq
    %v405 = vshrl.u32 %v404, 7
    %v406 = vadd.s32 %v405, 48
    %vm407 = vcmp.lt.s32.totalorder %v406, 196
    %v408 = vsel %vm407, %v402, %v16
    %v409 = vlaneseq
    %v410 = vand.u32 %v409, 127
    %vm412 = vcmp.lt.s32.totalorder %v410, 10
    %v413 = vsel %vm412, %v408, %v16
    %s414 = scalar_lea.vmem [#allocation18], 24
    %v415 = vpack.c.bf16 0.0, %v413
    %s417 = ssub.s32 16, 1
    %418 = vst [vmem:[%s414] sm:%s417] %v415
    %s419 = scalar_lea.vmem %s0, 28
    %s421 = sor.u32 255, 127
    %s422 = sand.u32 %s421, 85
    %s423 = sshrl.u32 %s422, 1
    %s424 = sor.u32 %s422, %s423
    %s425 = sand.u32 51, %s424
    %s426 = sshrl.u32 %s425, 2
    %s427 = sor.u32 %s425, %s426
    %s428 = sand.u32 15, %s427
    %v429 = vld [vmem:[%s419] sm:%s428]
    %v430 = vunpack.c.l.bf16 %v429
    %v431 = vunpack.c.h.bf16 %v429
    %v432 = vlaneseq
    %v433 = vshrl.u32 %v432, 7
    %v434 = vadd.s32 %v433, 56
    %vm435 = vcmp.lt.s32.totalorder %v434, 196
    %v436 = vsel %vm435, %v430, %v16
    %v437 = vlaneseq
    %v438 = vand.u32 %v437, 127
    %vm440 = vcmp.lt.s32.totalorder %v438, 10
    %v441 = vsel %vm440, %v436, %v16
    %s442 = scalar_lea.vmem [#allocation18], 28
    %v443 = vpack.c.bf16 0.0, %v441
    %s445 = ssub.s32 16, 1
    %446 = vst [vmem:[%s442] sm:%s445] %v443
    %s447 = scalar_lea.vmem %s0, 32
    %s449 = sor.u32 255, 127
    %s450 = sand.u32 %s449, 85
    %s451 = sshrl.u32 %s450, 1
    %s452 = sor.u32 %s450, %s451
    %s453 = sand.u32 51, %s452
    %s454 = sshrl.u32 %s453, 2
    %s455 = sor.u32 %s453, %s454
    %s456 = sand.u32 15, %s455
    %v457 = vld [vmem:[%s447] sm:%s456]
    %v458 = vunpack.c.l.bf16 %v457
    %v459 = vunpack.c.h.bf16 %v457
    %v460 = vlaneseq
    %v461 = vshrl.u32 %v460, 7
    %v462 = vadd.s32 %v461, 64
    %vm463 = vcmp.lt.s32.totalorder %v462, 196
    %v464 = vsel %vm463, %v458, %v16
    %v465 = vlaneseq
    %v466 = vand.u32 %v465, 127
    %vm468 = vcmp.lt.s32.totalorder %v466, 10
    %v469 = vsel %vm468, %v464, %v16
    %s470 = scalar_lea.vmem [#allocation18], 32
    %v471 = vpack.c.bf16 0.0, %v469
    %s473 = ssub.s32 16, 1
    %474 = vst [vmem:[%s470] sm:%s473] %v471
    %s475 = scalar_lea.vmem %s0, 36
    %s477 = sor.u32 255, 127
    %s478 = sand.u32 %s477, 85
    %s479 = sshrl.u32 %s478, 1
    %s480 = sor.u32 %s478, %s479
    %s481 = sand.u32 51, %s480
    %s482 = sshrl.u32 %s481, 2
    %s483 = sor.u32 %s481, %s482
    %s484 = sand.u32 15, %s483
    %v485 = vld [vmem:[%s475] sm:%s484]
    %v486 = vunpack.c.l.bf16 %v485
    %v487 = vunpack.c.h.bf16 %v485
    %v488 = vlaneseq
    %v489 = vshrl.u32 %v488, 7
    %v490 = vadd.s32 %v489, 72
    %vm491 = vcmp.lt.s32.totalorder %v490, 196
    %v492 = vsel %vm491, %v486, %v16
    %v493 = vlaneseq
    %v494 = vand.u32 %v493, 127
    %vm496 = vcmp.lt.s32.totalorder %v494, 10
    %v497 = vsel %vm496, %v492, %v16
    %s498 = scalar_lea.vmem [#allocation18], 36
    %v499 = vpack.c.bf16 0.0, %v497
    %s501 = ssub.s32 16, 1
    %502 = vst [vmem:[%s498] sm:%s501] %v499
    %s503 = scalar_lea.vmem %s0, 40
    %s505 = sor.u32 255, 127
    %s506 = sand.u32 %s505, 85
    %s507 = sshrl.u32 %s506, 1
    %s508 = sor.u32 %s506, %s507
    %s509 = sand.u32 51, %s508
    %s510 = sshrl.u32 %s509, 2
    %s511 = sor.u32 %s509, %s510
    %s512 = sand.u32 15, %s511
    %v513 = vld [vmem:[%s503] sm:%s512]
    %v514 = vunpack.c.l.bf16 %v513
    %v515 = vunpack.c.h.bf16 %v513
    %v516 = vlaneseq
    %v517 = vshrl.u32 %v516, 7
    %v518 = vadd.s32 %v517, 80
    %vm519 = vcmp.lt.s32.totalorder %v518, 196
    %v520 = vsel %vm519, %v514, %v16
    %v521 = vlaneseq
    %v522 = vand.u32 %v521, 127
    %vm524 = vcmp.lt.s32.totalorder %v522, 10
    %v525 = vsel %vm524, %v520, %v16
    %s526 = scalar_lea.vmem [#allocation18], 40
    %v527 = vpack.c.bf16 0.0, %v525
    %s529 = ssub.s32 16, 1
    %530 = vst [vmem:[%s526] sm:%s529] %v527
    %s531 = scalar_lea.vmem %s0, 44
    %s533 = sor.u32 255, 127
    %s534 = sand.u32 %s533, 85
    %s535 = sshrl.u32 %s534, 1
    %s536 = sor.u32 %s534, %s535
    %s537 = sand.u32 51, %s536
    %s538 = sshrl.u32 %s537, 2
    %s539 = sor.u32 %s537, %s538
    %s540 = sand.u32 15, %s539
    %v541 = vld [vmem:[%s531] sm:%s540]
    %v542 = vunpack.c.l.bf16 %v541
    %v543 = vunpack.c.h.bf16 %v541
    %v544 = vlaneseq
    %v545 = vshrl.u32 %v544, 7
    %v546 = vadd.s32 %v545, 88
    %vm547 = vcmp.lt.s32.totalorder %v546, 196
    %v548 = vsel %vm547, %v542, %v16
    %v549 = vlaneseq
    %v550 = vand.u32 %v549, 127
    %vm552 = vcmp.lt.s32.totalorder %v550, 10
    %v553 = vsel %vm552, %v548, %v16
    %s554 = scalar_lea.vmem [#allocation18], 44
    %v555 = vpack.c.bf16 0.0, %v553
    %s557 = ssub.s32 16, 1
    %558 = vst [vmem:[%s554] sm:%s557] %v555
    %s559 = scalar_lea.vmem %s0, 48
    %s561 = sor.u32 255, 127
    %s562 = sand.u32 %s561, 85
    %s563 = sshrl.u32 %s562, 1
    %s564 = sor.u32 %s562, %s563
    %s565 = sand.u32 51, %s564
    %s566 = sshrl.u32 %s565, 2
    %s567 = sor.u32 %s565, %s566
    %s568 = sand.u32 15, %s567
    %v569 = vld [vmem:[%s559] sm:%s568]
    %v570 = vunpack.c.l.bf16 %v569
    %v571 = vunpack.c.h.bf16 %v569
    %v572 = vlaneseq
    %v573 = vshrl.u32 %v572, 7
    %v574 = vadd.s32 %v573, 96
    %vm575 = vcmp.lt.s32.totalorder %v574, 196
    %v576 = vsel %vm575, %v570, %v16
    %v577 = vlaneseq
    %v578 = vand.u32 %v577, 127
    %vm580 = vcmp.lt.s32.totalorder %v578, 10
    %v581 = vsel %vm580, %v576, %v16
    %s582 = scalar_lea.vmem [#allocation18], 48
    %v583 = vpack.c.bf16 0.0, %v581
    %s585 = ssub.s32 16, 1
    %586 = vst [vmem:[%s582] sm:%s585] %v583
    %s587 = scalar_lea.vmem %s0, 52
    %s589 = sor.u32 255, 127
    %s590 = sand.u32 %s589, 85
    %s591 = sshrl.u32 %s590, 1
    %s592 = sor.u32 %s590, %s591
    %s593 = sand.u32 51, %s592
    %s594 = sshrl.u32 %s593, 2
    %s595 = sor.u32 %s593, %s594
    %s596 = sand.u32 15, %s595
    %v597 = vld [vmem:[%s587] sm:%s596]
    %v598 = vunpack.c.l.bf16 %v597
    %v599 = vunpack.c.h.bf16 %v597
    %v600 = vlaneseq
    %v601 = vshrl.u32 %v600, 7
    %v602 = vadd.s32 %v601, 104
    %vm603 = vcmp.lt.s32.totalorder %v602, 196
    %v604 = vsel %vm603, %v598, %v16
    %v605 = vlaneseq
    %v606 = vand.u32 %v605, 127
    %vm608 = vcmp.lt.s32.totalorder %v606, 10
    %v609 = vsel %vm608, %v604, %v16
    %s610 = scalar_lea.vmem [#allocation18], 52
    %v611 = vpack.c.bf16 0.0, %v609
    %s613 = ssub.s32 16, 1
    %614 = vst [vmem:[%s610] sm:%s613] %v611
    %s615 = scalar_lea.vmem %s0, 56
    %s617 = sor.u32 255, 127
    %s618 = sand.u32 %s617, 85
    %s619 = sshrl.u32 %s618, 1
    %s620 = sor.u32 %s618, %s619
    %s621 = sand.u32 51, %s620
    %s622 = sshrl.u32 %s621, 2
    %s623 = sor.u32 %s621, %s622
    %s624 = sand.u32 15, %s623
    %v625 = vld [vmem:[%s615] sm:%s624]
    %v626 = vunpack.c.l.bf16 %v625
    %v627 = vunpack.c.h.bf16 %v625
    %v628 = vlaneseq
    %v629 = vshrl.u32 %v628, 7
    %v630 = vadd.s32 %v629, 112
    %vm631 = vcmp.lt.s32.totalorder %v630, 196
    %v632 = vsel %vm631, %v626, %v16
    %v633 = vlaneseq
    %v634 = vand.u32 %v633, 127
    %vm636 = vcmp.lt.s32.totalorder %v634, 10
    %v637 = vsel %vm636, %v632, %v16
    %s638 = scalar_lea.vmem [#allocation18], 56
    %v639 = vpack.c.bf16 0.0, %v637
    %s641 = ssub.s32 16, 1
    %642 = vst [vmem:[%s638] sm:%s641] %v639
    %s643 = scalar_lea.vmem %s0, 60
    %s645 = sor.u32 255, 127
    %s646 = sand.u32 %s645, 85
    %s647 = sshrl.u32 %s646, 1
    %s648 = sor.u32 %s646, %s647
    %s649 = sand.u32 51, %s648
    %s650 = sshrl.u32 %s649, 2
    %s651 = sor.u32 %s649, %s650
    %s652 = sand.u32 15, %s651
    %v653 = vld [vmem:[%s643] sm:%s652]
    %v654 = vunpack.c.l.bf16 %v653
    %v655 = vunpack.c.h.bf16 %v653
    %v656 = vlaneseq
    %v657 = vshrl.u32 %v656, 7
    %v658 = vadd.s32 %v657, 120
    %vm659 = vcmp.lt.s32.totalorder %v658, 196
    %v660 = vsel %vm659, %v654, %v16
    %v661 = vlaneseq
    %v662 = vand.u32 %v661, 127
    %vm664 = vcmp.lt.s32.totalorder %v662, 10
    %v665 = vsel %vm664, %v660, %v16
    %s666 = scalar_lea.vmem [#allocation18], 60
    %v667 = vpack.c.bf16 0.0, %v665
    %s669 = ssub.s32 16, 1
    %670 = vst [vmem:[%s666] sm:%s669] %v667
    %s671 = scalar_lea.vmem %s0, 64
    %s673 = sor.u32 255, 127
    %s674 = sand.u32 %s673, 85
    %s675 = sshrl.u32 %s674, 1
    %s676 = sor.u32 %s674, %s675
    %s677 = sand.u32 51, %s676
    %s678 = sshrl.u32 %s677, 2
    %s679 = sor.u32 %s677, %s678
    %s680 = sand.u32 15, %s679
    %v681 = vld [vmem:[%s671] sm:%s680]
    %v682 = vunpack.c.l.bf16 %v681
    %v683 = vunpack.c.h.bf16 %v681
    %v684 = vlaneseq
    %v685 = vshrl.u32 %v684, 7
    %v686 = vadd.s32 %v685, 128
    %vm687 = vcmp.lt.s32.totalorder %v686, 196
    %v688 = vsel %vm687, %v682, %v16
    %v689 = vlaneseq
    %v690 = vand.u32 %v689, 127
    %vm692 = vcmp.lt.s32.totalorder %v690, 10
    %v693 = vsel %vm692, %v688, %v16
    %s694 = scalar_lea.vmem [#allocation18], 64
    %v695 = vpack.c.bf16 0.0, %v693
    %s697 = ssub.s32 16, 1
    %698 = vst [vmem:[%s694] sm:%s697] %v695
    %s699 = scalar_lea.vmem %s0, 68
    %s701 = sor.u32 255, 127
    %s702 = sand.u32 %s701, 85
    %s703 = sshrl.u32 %s702, 1
    %s704 = sor.u32 %s702, %s703
    %s705 = sand.u32 51, %s704
    %s706 = sshrl.u32 %s705, 2
    %s707 = sor.u32 %s705, %s706
    %s708 = sand.u32 15, %s707
    %v709 = vld [vmem:[%s699] sm:%s708]
    %v710 = vunpack.c.l.bf16 %v709
    %v711 = vunpack.c.h.bf16 %v709
    %v712 = vlaneseq
    %v713 = vshrl.u32 %v712, 7
    %v714 = vadd.s32 %v713, 136
    %vm715 = vcmp.lt.s32.totalorder %v714, 196
    %v716 = vsel %vm715, %v710, %v16
    %v717 = vlaneseq
    %v718 = vand.u32 %v717, 127
    %vm720 = vcmp.lt.s32.totalorder %v718, 10
    %v721 = vsel %vm720, %v716, %v16
    %s722 = scalar_lea.vmem [#allocation18], 68
    %v723 = vpack.c.bf16 0.0, %v721
    %s725 = ssub.s32 16, 1
    %726 = vst [vmem:[%s722] sm:%s725] %v723
    %s727 = scalar_lea.vmem %s0, 72
    %s729 = sor.u32 255, 127
    %s730 = sand.u32 %s729, 85
    %s731 = sshrl.u32 %s730, 1
    %s732 = sor.u32 %s730, %s731
    %s733 = sand.u32 51, %s732
    %s734 = sshrl.u32 %s733, 2
    %s735 = sor.u32 %s733, %s734
    %s736 = sand.u32 15, %s735
    %v737 = vld [vmem:[%s727] sm:%s736]
    %v738 = vunpack.c.l.bf16 %v737
    %v739 = vunpack.c.h.bf16 %v737
    %v740 = vlaneseq
    %v741 = vshrl.u32 %v740, 7
    %v742 = vadd.s32 %v741, 144
    %vm743 = vcmp.lt.s32.totalorder %v742, 196
    %v744 = vsel %vm743, %v738, %v16
    %v745 = vlaneseq
    %v746 = vand.u32 %v745, 127
    %vm748 = vcmp.lt.s32.totalorder %v746, 10
    %v749 = vsel %vm748, %v744, %v16
    %s750 = scalar_lea.vmem [#allocation18], 72
    %v751 = vpack.c.bf16 0.0, %v749
    %s753 = ssub.s32 16, 1
    %754 = vst [vmem:[%s750] sm:%s753] %v751
    %s755 = scalar_lea.vmem %s0, 76
    %s757 = sor.u32 255, 127
    %s758 = sand.u32 %s757, 85
    %s759 = sshrl.u32 %s758, 1
    %s760 = sor.u32 %s758, %s759
    %s761 = sand.u32 51, %s760
    %s762 = sshrl.u32 %s761, 2
    %s763 = sor.u32 %s761, %s762
    %s764 = sand.u32 15, %s763
    %v765 = vld [vmem:[%s755] sm:%s764]
    %v766 = vunpack.c.l.bf16 %v765
    %v767 = vunpack.c.h.bf16 %v765
    %v768 = vlaneseq
    %v769 = vshrl.u32 %v768, 7
    %v770 = vadd.s32 %v769, 152
    %vm771 = vcmp.lt.s32.totalorder %v770, 196
    %v772 = vsel %vm771, %v766, %v16
    %v773 = vlaneseq
    %v774 = vand.u32 %v773, 127
    %vm776 = vcmp.lt.s32.totalorder %v774, 10
    %v777 = vsel %vm776, %v772, %v16
    %s778 = scalar_lea.vmem [#allocation18], 76
    %v779 = vpack.c.bf16 0.0, %v777
    %s781 = ssub.s32 16, 1
    %782 = vst [vmem:[%s778] sm:%s781] %v779
    %s783 = scalar_lea.vmem %s0, 80
    %s785 = sor.u32 255, 127
    %s786 = sand.u32 %s785, 85
    %s787 = sshrl.u32 %s786, 1
    %s788 = sor.u32 %s786, %s787
    %s789 = sand.u32 51, %s788
    %s790 = sshrl.u32 %s789, 2
    %s791 = sor.u32 %s789, %s790
    %s792 = sand.u32 15, %s791
    %v793 = vld [vmem:[%s783] sm:%s792]
    %v794 = vunpack.c.l.bf16 %v793
    %v795 = vunpack.c.h.bf16 %v793
    %v796 = vlaneseq
    %v797 = vshrl.u32 %v796, 7
    %v798 = vadd.s32 %v797, 160
    %vm799 = vcmp.lt.s32.totalorder %v798, 196
    %v800 = vsel %vm799, %v794, %v16
    %v801 = vlaneseq
    %v802 = vand.u32 %v801, 127
    %vm804 = vcmp.lt.s32.totalorder %v802, 10
    %v805 = vsel %vm804, %v800, %v16
    %s806 = scalar_lea.vmem [#allocation18], 80
    %v807 = vpack.c.bf16 0.0, %v805
    %s809 = ssub.s32 16, 1
    %810 = vst [vmem:[%s806] sm:%s809] %v807
    %s811 = scalar_lea.vmem %s0, 84
    %s813 = sor.u32 255, 127
    %s814 = sand.u32 %s813, 85
    %s815 = sshrl.u32 %s814, 1
    %s816 = sor.u32 %s814, %s815
    %s817 = sand.u32 51, %s816
    %s818 = sshrl.u32 %s817, 2
    %s819 = sor.u32 %s817, %s818
    %s820 = sand.u32 15, %s819
    %v821 = vld [vmem:[%s811] sm:%s820]
    %v822 = vunpack.c.l.bf16 %v821
    %v823 = vunpack.c.h.bf16 %v821
    %v824 = vlaneseq
    %v825 = vshrl.u32 %v824, 7
    %v826 = vadd.s32 %v825, 168
    %vm827 = vcmp.lt.s32.totalorder %v826, 196
    %v828 = vsel %vm827, %v822, %v16
    %v829 = vlaneseq
    %v830 = vand.u32 %v829, 127
    %vm832 = vcmp.lt.s32.totalorder %v830, 10
    %v833 = vsel %vm832, %v828, %v16
    %s834 = scalar_lea.vmem [#allocation18], 84
    %v835 = vpack.c.bf16 0.0, %v833
    %s837 = ssub.s32 16, 1
    %838 = vst [vmem:[%s834] sm:%s837] %v835
    %s839 = scalar_lea.vmem %s0, 88
    %s841 = sor.u32 255, 127
    %s842 = sand.u32 %s841, 85
    %s843 = sshrl.u32 %s842, 1
    %s844 = sor.u32 %s842, %s843
    %s845 = sand.u32 51, %s844
    %s846 = sshrl.u32 %s845, 2
    %s847 = sor.u32 %s845, %s846
    %s848 = sand.u32 15, %s847
    %v849 = vld [vmem:[%s839] sm:%s848]
    %v850 = vunpack.c.l.bf16 %v849
    %v851 = vunpack.c.h.bf16 %v849
    %v852 = vlaneseq
    %v853 = vshrl.u32 %v852, 7
    %v854 = vadd.s32 %v853, 176
    %vm855 = vcmp.lt.s32.totalorder %v854, 196
    %v856 = vsel %vm855, %v850, %v16
    %v857 = vlaneseq
    %v858 = vand.u32 %v857, 127
    %vm860 = vcmp.lt.s32.totalorder %v858, 10
    %v861 = vsel %vm860, %v856, %v16
    %s862 = scalar_lea.vmem [#allocation18], 88
    %v863 = vpack.c.bf16 0.0, %v861
    %s865 = ssub.s32 16, 1
    %866 = vst [vmem:[%s862] sm:%s865] %v863
    %s867 = scalar_lea.vmem %s0, 92
    %s869 = sor.u32 255, 127
    %s870 = sand.u32 %s869, 85
    %s871 = sshrl.u32 %s870, 1
    %s872 = sor.u32 %s870, %s871
    %s873 = sand.u32 51, %s872
    %s874 = sshrl.u32 %s873, 2
    %s875 = sor.u32 %s873, %s874
    %s876 = sand.u32 15, %s875
    %v877 = vld [vmem:[%s867] sm:%s876]
    %v878 = vunpack.c.l.bf16 %v877
    %v879 = vunpack.c.h.bf16 %v877
    %v880 = vlaneseq
    %v881 = vshrl.u32 %v880, 7
    %v882 = vadd.s32 %v881, 184
    %vm883 = vcmp.lt.s32.totalorder %v882, 196
    %v884 = vsel %vm883, %v878, %v16
    %v885 = vlaneseq
    %v886 = vand.u32 %v885, 127
    %vm888 = vcmp.lt.s32.totalorder %v886, 10
    %v889 = vsel %vm888, %v884, %v16
    %s890 = scalar_lea.vmem [#allocation18], 92
    %v891 = vpack.c.bf16 0.0, %v889
    %s893 = ssub.s32 16, 1
    %894 = vst [vmem:[%s890] sm:%s893] %v891
    %s895 = scalar_lea.vmem %s0, 96
    %s897 = sor.u32 255, 127
    %s898 = sand.u32 %s897, 85
    %s899 = sshrl.u32 %s898, 1
    %s900 = sor.u32 %s898, %s899
    %s901 = sand.u32 51, %s900
    %s902 = sshrl.u32 %s901, 2
    %s903 = sor.u32 %s901, %s902
    %s904 = sand.u32 15, %s903
    %v905 = vld [vmem:[%s895] sm:%s904]
    %v906 = vunpack.c.l.bf16 %v905
    %v907 = vunpack.c.h.bf16 %v905
    %v908 = vlaneseq
    %v909 = vshrl.u32 %v908, 7
    %v910 = vadd.s32 %v909, 192
    %vm911 = vcmp.lt.s32.totalorder %v910, 196
    %v912 = vsel %vm911, %v906, %v16
    %v913 = vlaneseq
    %v914 = vand.u32 %v913, 127
    %vm916 = vcmp.lt.s32.totalorder %v914, 10
    %v917 = vsel %vm916, %v912, %v16
    %s918 = scalar_lea.vmem [#allocation18], 96
    %v919 = vpack.c.bf16 0.0, %v917
    %s921 = ssub.s32 16, 1
    %922 = vst [vmem:[%s918] sm:%s921] %v919
    %s923 = scalar_lea.vmem [#allocation18], 100
    %v924 = vpack.c.bf16 0.0, %v16
    %s926 = ssub.s32 16, 1
    %927 = vst [vmem:[%s923] sm:%s926] %v924
    %s928 = scalar_lea.vmem [#allocation18], 104
    %v929 = vpack.c.bf16 0.0, %v16
    %s931 = ssub.s32 16, 1
    %932 = vst [vmem:[%s928] sm:%s931] %v929
    %s933 = scalar_lea.vmem [#allocation18], 108
    %v934 = vpack.c.bf16 0.0, %v16
    %s936 = ssub.s32 16, 1
    %937 = vst [vmem:[%s933] sm:%s936] %v934
    %s938 = scalar_lea.vmem [#allocation18], 112
    %v939 = vpack.c.bf16 0.0, %v16
    %s941 = ssub.s32 16, 1
    %942 = vst [vmem:[%s938] sm:%s941] %v939
    %s943 = scalar_lea.vmem [#allocation18], 116
    %v944 = vpack.c.bf16 0.0, %v16
    %s946 = ssub.s32 16, 1
    %947 = vst [vmem:[%s943] sm:%s946] %v944
    %s948 = scalar_lea.vmem [#allocation18], 120
    %v949 = vpack.c.bf16 0.0, %v16
    %s951 = ssub.s32 16, 1
    %952 = vst [vmem:[%s948] sm:%s951] %v949
    %s953 = scalar_lea.vmem [#allocation18], 124
    %v954 = vpack.c.bf16 0.0, %v16
    %s956 = ssub.s32 16, 1
    %957 = vst [vmem:[%s953] sm:%s956] %v954
    %v958 = vld [vmem:[%s3] sm:$0x1]
    %v959 = vlaneseq
    %vm961 = vcmp.lt.s32.totalorder %v959, 10
    %v962 = vsel %vm961, %v958, %v20
    %s964 = ssub.s32 2, 1
    %965 = vst [vmem:[#allocation19] sm:%s964] %v962
    %v967 = vld [vmem:[#allocation17] sm:$0xff]
    %s968 = scalar_lea.vmem [#allocation17], 8
    %v969 = vld [vmem:[%s968] sm:$0xff]
    %v970 = vmax.bf16 %v967, %v969
    %s971 = scalar_lea.vmem [#allocation17], 16
    %v972 = vld [vmem:[%s971] sm:$0xff]
    %s973 = scalar_lea.vmem [#allocation17], 24
    %v974 = vld [vmem:[%s973] sm:$0xff]
    %v975 = vmax.bf16 %v972, %v974
    %v976 = vmax.bf16 %v970, %v975
    %v977 = vld [vmem:[#allocation18] sm:$0xf]
    %v978 = vld [vmem:[#allocation18 + $0x4] sm:$0xf]
    %v979 = vld [vmem:[#allocation18 + $0x8] sm:$0xf]
    %v980 = vld [vmem:[#allocation18 + $0xc] sm:$0xf]
    %v981 = vld [vmem:[#allocation18 + $0x10] sm:$0xf]
    %v982 = vld [vmem:[#allocation18 + $0x14] sm:$0xf]
    %v983 = vld [vmem:[#allocation18 + $0x18] sm:$0xf]
    %v984 = vld [vmem:[#allocation18 + $0x1c] sm:$0xf]
    %v985 = vld [vmem:[#allocation18 + $0x20] sm:$0xf]
    %v986 = vld [vmem:[#allocation18 + $0x24] sm:$0xf]
    %v987 = vld [vmem:[#allocation18 + $0x28] sm:$0xf]
    %v988 = vld [vmem:[#allocation18 + $0x2c] sm:$0xf]
    %v989 = vld [vmem:[#allocation18 + $0x30] sm:$0xf]
    %v990 = vld [vmem:[#allocation18 + $0x34] sm:$0xf]
    %v991 = vld [vmem:[#allocation18 + $0x38] sm:$0xf]
    %v992 = vld [vmem:[#allocation18 + $0x3c] sm:$0xf]
    %v993 = vld [vmem:[#allocation18 + $0x40] sm:$0xf]
    %v994 = vld [vmem:[#allocation18 + $0x44] sm:$0xf]
    %v995 = vld [vmem:[#allocation18 + $0x48] sm:$0xf]
    %v996 = vld [vmem:[#allocation18 + $0x4c] sm:$0xf]
    %v997 = vld [vmem:[#allocation18 + $0x50] sm:$0xf]
    %v998 = vld [vmem:[#allocation18 + $0x54] sm:$0xf]
    %v999 = vld [vmem:[#allocation18 + $0x58] sm:$0xf]
    %v1000 = vld [vmem:[#allocation18 + $0x5c] sm:$0xf]
    %v1001 = vld [vmem:[#allocation18 + $0x60] sm:$0xf]
    %v1002 = vld [vmem:[#allocation18 + $0x64] sm:$0xf]
    %v1003 = vld [vmem:[#allocation18 + $0x68] sm:$0xf]
    %v1004 = vld [vmem:[#allocation18 + $0x6c] sm:$0xf]
    %v1005 = vld [vmem:[#allocation18 + $0x70] sm:$0xf]
    %v1006 = vld [vmem:[#allocation18 + $0x74] sm:$0xf]
    %v1007 = vld [vmem:[#allocation18 + $0x78] sm:$0xf]
    %v1008 = vld [vmem:[#allocation18 + $0x7c] sm:$0xf]
    %v1009 = vld [vmem:[#allocation19] sm:$0x1]
    %v1011 = vlaneseq
    %v1012 = vshrl.u32 %v1011, 7
    %v1013 = vsub.s32 0, %v1012
    %v1014 = vrot.slane %v1009, %v1013
    %v1017 = vunpack.c.l.b16 %v976
    %v1018 = vunpack.c.h.b16 %v976
    %v1019 = vpack.c.b16 %v1017, %v1017
    %v1020 = vpack.c.b16 %v1018, %v1018
    %v1055 = vunpack.c.l.b16 %v977
    %v1056 = vunpack.c.l.b16 %v978
    %v1057 = vunpack.c.l.b16 %v979
    %v1058 = vunpack.c.l.b16 %v980
    %v1059 = vunpack.c.l.b16 %v981
    %v1060 = vunpack.c.l.b16 %v982
    %v1061 = vunpack.c.l.b16 %v983
    %v1062 = vunpack.c.l.b16 %v984
    %v1063 = vunpack.c.l.b16 %v985
    %v1064 = vunpack.c.l.b16 %v986
    %v1065 = vunpack.c.l.b16 %v987
    %v1066 = vunpack.c.l.b16 %v988
    %v1067 = vunpack.c.l.b16 %v989
    %v1068 = vunpack.c.l.b16 %v990
    %v1069 = vunpack.c.l.b16 %v991
    %v1070 = vunpack.c.l.b16 %v992
    %v1071 = vunpack.c.l.b16 %v993
    %v1072 = vunpack.c.l.b16 %v994
    %v1073 = vunpack.c.l.b16 %v995
    %v1074 = vunpack.c.l.b16 %v996
    %v1075 = vunpack.c.l.b16 %v997
    %v1076 = vunpack.c.l.b16 %v998
    %v1077 = vunpack.c.l.b16 %v999
    %v1078 = vunpack.c.l.b16 %v1000
    %v1079 = vunpack.c.l.b16 %v1001
    %v1080 = vunpack.c.l.b16 %v1002
    %v1081 = vunpack.c.l.b16 %v1003
    %v1082 = vunpack.c.l.b16 %v1004
    %v1083 = vunpack.c.l.b16 %v1005
    %v1084 = vunpack.c.l.b16 %v1006
    %v1085 = vunpack.c.l.b16 %v1007
    %v1086 = vunpack.c.l.b16 %v1008
    %v1087 = vpack.c.b16 %v1056, %v1055
    %v1088 = vpack.c.b16 %v1058, %v1057
    %v1089 = vpack.c.b16 %v1060, %v1059
    %v1090 = vpack.c.b16 %v1062, %v1061
    %v1091 = vpack.c.b16 %v1064, %v1063
    %v1092 = vpack.c.b16 %v1066, %v1065
    %v1093 = vpack.c.b16 %v1068, %v1067
    %v1094 = vpack.c.b16 %v1070, %v1069
    %v1095 = vpack.c.b16 %v1072, %v1071
    %v1096 = vpack.c.b16 %v1074, %v1073
    %v1097 = vpack.c.b16 %v1076, %v1075
    %v1098 = vpack.c.b16 %v1078, %v1077
    %v1099 = vpack.c.b16 %v1080, %v1079
    %v1100 = vpack.c.b16 %v1082, %v1081
    %v1101 = vpack.c.b16 %v1084, %v1083
    %v1102 = vpack.c.b16 %v1086, %v1085
    %1119 = vmatprep.subr.bf16.mxu0 0
    %1120 = vmatpush1.bf16.msra.mxu0 %v1094
    %1121 = vmatprep.subr.bf16.mxu0 0
    %1122 = vmatpush1.bf16.msra.mxu0 %v1093
    %1123 = vmatprep.subr.bf16.mxu0 0
    %1124 = vmatpush1.bf16.msra.mxu0 %v1092
    %1125 = vmatprep.subr.bf16.mxu0 0
    %1126 = vmatpush1.bf16.msra.mxu0 %v1091
    %1127 = vmatprep.subr.bf16.mxu0 0
    %1128 = vmatpush1.bf16.msra.mxu0 %v1090
    %1129 = vmatprep.subr.bf16.mxu0 0
    %1130 = vmatpush1.bf16.msra.mxu0 %v1089
    %1131 = vmatprep.subr.bf16.mxu0 0
    %1132 = vmatpush1.bf16.msra.mxu0 %v1088
    %1133 = vmatprep.subr.bf16.mxu0 0
    %1134 = vmatpush1.bf16.msra.mxu0 %v1087
    %1135 = vmatprep.subr.bf16.mxu0 0
    %1136 = vmatpush2.bf16.msra.mxu0 %v1102
    %1137 = vmatprep.subr.bf16.mxu0 0
    %1138 = vmatpush2.bf16.msra.mxu0 %v1101
    %1139 = vmatprep.subr.bf16.mxu0 0
    %1140 = vmatpush2.bf16.msra.mxu0 %v1100
    %1141 = vmatprep.subr.bf16.mxu0 0
    %1142 = vmatpush2.bf16.msra.mxu0 %v1099
    %1143 = vmatprep.subr.bf16.mxu0 0
    %1144 = vmatpush2.bf16.msra.mxu0 %v1098
    %1145 = vmatprep.subr.bf16.mxu0 0
    %1146 = vmatpush2.bf16.msra.mxu0 %v1097
    %1147 = vmatprep.subr.bf16.mxu0 0
    %1148 = vmatpush2.bf16.msra.mxu0 %v1096
    %1149 = vmatprep.subr.bf16.mxu0 0
    %1150 = vmatpush2.bf16.msra.mxu0 %v1095
    %1151 = vmatprep.mubr.bf16.mxu0 %v1020
    %1152 = vmatmul.mubr.bf16.gmra.mxu0 %v1019
    %v1153 = vpop.f32.mrf.mxu0
    %v1154 = vadd.f32 %v1014, %v1153
    %v1155 = vpop.f32.mrf.mxu0
    %v1156 = vpop.f32.mrf.mxu0
    %v1157 = vpop.f32.mrf.mxu0
    %1158 = vdwg.mxu0
    %v1159 = vmax.f32 %v1154, 0.0
    %1160 = vst [vmem:[%s5] sm:$0xff] %v1159
    // Predicated region
    $region14: #{net_forward.2} parent=1 // pred_check
      _
    $region15: #{net_forward.2} parent=1 // pred_check_branch
      %1162 = sbr.rel (0) target = $region17
    $region16: #{net_forward.2} parent=1 // pred_region
      _
    $region17: #{net_forward.2} parent=1 // pred_fallthru
      _
    // Predicated region
    $region18: #{net_forward.2} parent=1 // pred_check
      _
    $region19: #{net_forward.2} parent=1 // pred_check_branch
      %1164 = sbr.rel (0) target = $region21
    $region20: #{net_forward.2} parent=1 // pred_region
      _
    $region21: #{net_forward.2} parent=1 // pred_fallthru
      _

</llo_original>
